<compile_context>
chip_gen: v7x
topology: tpu7x:2x2x1
jax: 0.10.0
libtpu: 0.0.40
codegen_flags: <defaults>
</compile_context>

<pallas_src>
import functools

import jax
import jax.numpy as jnp
from jax.experimental import pallas as pl
from jax.experimental.pallas import tpu as pltpu


def _round_up(x, m):
    return ((x + m - 1) // m) * m


def _vmem_budget_bytes(tm, tn, K, x_itemsize, w_itemsize, out_itemsize):
    """Scoped-VMEM budget: double-buffered tiles + f32 elementwise temporaries."""
    x_tile = tm * K * x_itemsize
    w_tile = K * tn * w_itemsize
    o_tile = tm * tn * out_itemsize
    rms_row = 8 * max(K, 128) * 4                      # (1, K) padded to 8 sublanes
    f32_tmp = 3 * tm * K * 4                           # x_f32, x^2, normalized h
    need = 2 * (x_tile + w_tile + o_tile) + 2 * rms_row + f32_tmp
    need = int(need * 1.25) + (4 << 20)                # headroom for Mosaic scratch
    return max(32 << 20, min(need, 110 << 20))


def _rmsnorm_matmul_kernel(x_ref, rmsw_ref, mmw_ref, o_ref, *, eps, scale_in_f32):
    # x_ref:    (tm, K)   current row tile of the flattened input
    # rmsw_ref: (1, K)    RMSNorm weight (resident; already cast to x.dtype)
    # mmw_ref:  (K, tn)   current weight tile (DMA'd once per outer N step)
    # o_ref:    (tm, tn)  output tile
    input_dtype = x_ref.dtype
    x_f32 = x_ref[...].astype(jnp.float32)

    # Per-row rsqrt(mean(x^2) + eps); recomputed per tile (hidden under the MXU
    # time at tn >= 512, and keeps the grid free of ordering constraints).
    variance = jnp.mean(x_f32 * x_f32, axis=-1, keepdims=True)     # (tm, 1)
    inv_rms = jax.lax.rsqrt(variance + eps)                        # EUP rsqrt

    if scale_in_f32:
        # v5e-friendly path (no bf16 VPU ALUs there): do every elementwise op
        # in f32 and cast exactly once right before the MXU.  Rounding differs
        # slightly from torch (weight applied before the low-precision cast).
        h = (x_f32 * inv_rms * rmsw_ref[...].astype(jnp.float32)).astype(input_dtype)
    else:
        # Torch-faithful: normalize in f32, cast back to the input dtype, then
        # scale by rms_w (matches: weight * hidden_states.to(input_dtype)).
        # rms_w is pre-cast to x.dtype, so the MXU LHS stays bf16 when x is.
        h = rmsw_ref[...] * (x_f32 * inv_rms).astype(input_dtype)

    # Matmul with the current weight tile on the MXU; accumulate in f32.
    acc = jnp.dot(h, mmw_ref[...], preferred_element_type=jnp.float32)
    o_ref[...] = acc.astype(o_ref.dtype)


def rmsnorm_matmul(x, rms_w, mm_w, *, eps=1e-6, tm=256, tn=512,
                   scale_in_f32=False, vmem_limit_bytes=None):
    """x: (..., K); rms_w: (K,); mm_w: (K, N). Returns (..., N).

    tm: row tile (multiple of 8). 256 for v6e/v7x (2x256x256 MXU), 128 for v5e.
    tn: output-column tile (multiple of 128) — the primary knob: x is re-read
        N/tn times from HBM. 512 default; 1024+ on v6e; size so the footprint
        stays <= ~56 MiB on v7x.
    scale_in_f32: apply rms_w in f32 with a single pre-MXU cast (v5e + bf16).
    """
    assert eps > 0.0, "eps must be > 0 (padded rows rely on rsqrt(eps) finite)"
    *lead, K = x.shape
    K2, N = mm_w.shape
    assert K2 == K, "mm_w first dim must match hidden size"
    out_dtype = jnp.result_type(x.dtype, mm_w.dtype)

    x2 = x.reshape(-1, K)
    M = x2.shape[0]

    # Clamp tiles for small problems (sublane dim multiple of 8, lane dim
    # multiple of 128 or the full extent).
    tm = min(tm, _round_up(M, 8))
    tn = min(tn, _round_up(N, 128))

    # Pad rows / output columns to tile multiples (zeros; padded rows produce
    # zero output, padded columns are sliced off).
    M_pad = _round_up(M, tm)
    N_pad = _round_up(N, tn)
    if M_pad != M:
        x2 = jnp.pad(x2, ((0, M_pad - M), (0, 0)))
    mm_w_p = mm_w if N_pad == N else jnp.pad(mm_w, ((0, 0), (0, N_pad - N)))
    # Cast rms_w to the activation dtype so the MXU LHS stays low-precision
    # (torch promotes here if dtypes differ; keeping x.dtype is the perf-correct
    # choice and is exact when dtypes already match, as in the torch module).
    rms_w2 = rms_w.astype(x.dtype).reshape(1, K)

    n_n = N_pad // tn   # outer grid axis: weight / output column tiles
    n_m = M_pad // tm   # inner grid axis: row tiles

    if vmem_limit_bytes is None:
        vmem_limit_bytes = _vmem_budget_bytes(
            tm, tn, K, x2.dtype.itemsize, mm_w_p.dtype.itemsize,
            jnp.dtype(out_dtype).itemsize)

    kernel = functools.partial(_rmsnorm_matmul_kernel, eps=eps,
                               scale_in_f32=scale_in_f32)

    out = pl.pallas_call(
        kernel,
        out_shape=jax.ShapeDtypeStruct((M_pad, N_pad), out_dtype),
        grid_spec=pltpu.PrefetchScalarGridSpec(
            num_scalar_prefetch=0,
            # N outer, rows inner: the weight tile's block index is constant
            # across the inner axis, so each (K, tn) tile is DMA'd from HBM
            # exactly once per outer step instead of n_m times.
            grid=(n_n, n_m),
            in_specs=[
                pl.BlockSpec((tm, K), lambda j, i: (i, 0)),   # x rows
                pl.BlockSpec((1, K), lambda j, i: (0, 0)),    # rms weight (resident)
                pl.BlockSpec((K, tn), lambda j, i: (0, j)),   # matmul weight tile
            ],
            out_specs=pl.BlockSpec((tm, tn), lambda j, i: (i, j)),
        ),
        compiler_params=pltpu.CompilerParams(
            # No cross-step state (inv_rms is recomputed per tile), so the row
            # axis can be sharded across TensorCores on v7x; keep the N axis
            # "arbitrary" so each core's weight tile stays resident across its
            # inner row sweep.
            dimension_semantics=("arbitrary", "parallel"),
            vmem_limit_bytes=vmem_limit_bytes,
        ),
        cost_estimate=pl.CostEstimate(
            flops=2 * M * K * N,
            transcendentals=M * n_n,     # rsqrt recomputed once per N tile
            bytes_accessed=(
                M * K * x2.dtype.itemsize * n_n      # x re-read once per N tile
                + K * N * mm_w.dtype.itemsize
                + K * rms_w.dtype.itemsize
                + M * N * jnp.dtype(out_dtype).itemsize
            ),
        ),
    )(x2, rms_w2, mm_w_p)

    out = out[:M, :N]
    return out.reshape(*lead, N)


def _reference(x, rms_w, mm_w, eps=1e-6):
    input_dtype = x.dtype
    h = x.astype(jnp.float32)
    variance = jnp.mean(h * h, axis=-1, keepdims=True)
    h = h * jax.lax.rsqrt(variance + eps)
    h = rms_w * h.astype(input_dtype)
    return jnp.matmul(h, mm_w)


if __name__ == "__main__":
    # Small shapes consistent with the module: batch=2, seq=8, hidden=32, out=64.
    batch, seq, hidden, out_dim = 2, 8, 32, 64

    key = jax.random.PRNGKey(0)
    kx, kw, km = jax.random.split(key, 3)
    x = jax.random.normal(kx, (batch, seq, hidden), dtype=jnp.float32)
    rms_w = jax.random.normal(kw, (hidden,), dtype=jnp.float32) * 0.1 + 1.0
    mm_w = jax.random.normal(km, (hidden, out_dim), dtype=jnp.float32) * 0.05

    out = rmsnorm_matmul(x, rms_w, mm_w)
    out = jax.block_until_ready(out)

    ref = _reference(x, rms_w, mm_w)
    assert out.shape == (batch, seq, out_dim)
    assert jnp.allclose(out, ref, atol=1e-4, rtol=1e-4), "mismatch vs reference"

    print("KERNEL_OK")
</pallas_src>

<mosaic_0001>
module attributes {stable_mosaic.version = 11 : i64} {
  func.func @_rmsnorm_matmul_kernel(%arg0: i32, %arg1: i32, %arg2: memref<16x32xf32, #tpu.memory_space<vmem>>, %arg3: memref<1x32xf32, #tpu.memory_space<vmem>>, %arg4: memref<32x128xf32, #tpu.memory_space<vmem>>, %arg5: memref<16x128xf32, #tpu.memory_space<vmem>>) attributes {dimension_semantics = [#tpu.dimension_semantics<arbitrary>, #tpu.dimension_semantics<parallel>], iteration_bounds = array<i64: 1, 1>, scalar_prefetch = 0 : i64, scratch_operands = 0 : i64, tpu.core_type = #tpu.core_type<tc>, window_params = [{transform_indices = @transform_0, window_bounds = array<i64: 16, 32>}, {pipeline_mode = #tpu.pipeline_mode<synchronous>, transform_indices = @transform_1, window_bounds = array<i64: 1, 32>}, {transform_indices = @transform_2, window_bounds = array<i64: 32, 128>}, {transform_indices = @transform_3, window_bounds = array<i64: 16, 128>}]} {
    %c0 = arith.constant 0 : index
    %c0_0 = arith.constant 0 : index
    %0 = vector.load %arg2[%c0, %c0_0] : memref<16x32xf32, #tpu.memory_space<vmem>>, vector<16x32xf32>
    %1 = arith.mulf %0, %0 : vector<16x32xf32>
    %cst = arith.constant dense<0.000000e+00> : vector<16xf32>
    %2 = vector.multi_reduction <add>, %1, %cst [1] : vector<16x32xf32> to vector<16xf32>
    %3 = vector.shape_cast %2 : vector<16xf32> to vector<16x1xf32>
    %cst_1 = arith.constant 3.200000e+01 : f32
    %4 = vector.broadcast %cst_1 : f32 to vector<16x1xf32>
    %5 = arith.divf %3, %4 : vector<16x1xf32>
    %cst_2 = arith.constant 9.99999997E-7 : f32
    %6 = vector.broadcast %cst_2 : f32 to vector<16x1xf32>
    %7 = arith.addf %5, %6 : vector<16x1xf32>
    %8 = math.rsqrt %7 : vector<16x1xf32>
    %c0_3 = arith.constant 0 : index
    %c0_4 = arith.constant 0 : index
    %9 = vector.load %arg3[%c0_3, %c0_4] : memref<1x32xf32, #tpu.memory_space<vmem>>, vector<1x32xf32>
    %10 = vector.broadcast %8 : vector<16x1xf32> to vector<16x32xf32>
    %11 = arith.mulf %0, %10 : vector<16x32xf32>
    %12 = vector.broadcast %9 : vector<1x32xf32> to vector<16x32xf32>
    %13 = arith.mulf %12, %11 : vector<16x32xf32>
    %c0_5 = arith.constant 0 : index
    %c0_6 = arith.constant 0 : index
    %14 = vector.load %arg4[%c0_5, %c0_6] : memref<32x128xf32, #tpu.memory_space<vmem>>, vector<32x128xf32>
    %cst_7 = arith.constant dense<0.000000e+00> : vector<16x128xf32>
    %15 = tpu.matmul %13, %14, %cst_7 {dimension_numbers = #tpu.dot_dimension_numbers<[1], [0], [0], [1], [0, 0, 1, 1], [], []>} : vector<16x32xf32>, vector<32x128xf32>, vector<16x128xf32> -> vector<16x128xf32>
    %c0_8 = arith.constant 0 : index
    %c0_9 = arith.constant 0 : index
    %16 = vector.load %arg5[%c0_8, %c0_9] : memref<16x128xf32, #tpu.memory_space<vmem>>, vector<16x128xf32>
    tpu.vector_store %arg5[%c0_8, %c0_9], %15 {strides = array<i32>} : memref<16x128xf32, #tpu.memory_space<vmem>>, vector<16x128xf32>,
    return
  }
  func.func @transform_0(%arg0: i32, %arg1: i32) -> (i32, i32) {
    %c0_i32 = arith.constant 0 : i32
    %c0_i32_0 = arith.constant 0 : i32
    return %arg1, %c0_i32 : i32, i32
  }
  func.func @transform_1(%arg0: i32, %arg1: i32) -> (i32, i32) {
    %c0_i32 = arith.constant 0 : i32
    %c0_i32_0 = arith.constant 0 : i32
    %c0_i32_1 = arith.constant 0 : i32
    return %c0_i32, %c0_i32_0 : i32, i32
  }
  func.func @transform_2(%arg0: i32, %arg1: i32) -> (i32, i32) {
    %c0_i32 = arith.constant 0 : i32
    %c0_i32_0 = arith.constant 0 : i32
    return %c0_i32, %arg0 : i32, i32
  }
  func.func @transform_3(%arg0: i32, %arg1: i32) -> (i32, i32) {
    %c0_i32 = arith.constant 0 : i32
    return %arg1, %arg0 : i32, i32
  }
}

</mosaic_0001>

<llo_original>
// kernel: tpu_custom_call.1
$region0: #{tpu_custom_call.1}
  #allocation0 [shape = 'u32[]', space=smem, size = 0x4, offset = 0x4, fixed_abs, tag = 'smem constant byte address 0x4 - core index']
  #allocation1 [shape = 'u32[144,128]{1,0:T(1,128)}', space=vmem, size = 0x12000, scoped, tag = 'internal scratch']
  %s0 = inlined_call_operand.hbm [shape: f32[16,32], index: 0, kind: input, shape index: {}]
  %s1 = inlined_call_operand.vmem [shape: f32[1,32], index: 1, kind: input, shape index: {}]
  %s2 = inlined_call_operand.hbm [shape: f32[32,128], index: 2, kind: input, shape index: {}]
  %s3 = inlined_call_operand.hbm [shape: f32[16,128], index: 3, kind: output, shape index: {}]
  %s4 = sld [smem:[#allocation0]]
  $region30: #{tpu_custom_call.1} parent=0
    _
  %s6 = ssub.s32 1, %s4
  %s7 = scalar_select 0, %s6, %s4
  $region1: #{tpu_custom_call.1} parent=0
    #allocation2 [shape = 'u8[8192]{0}', space=vmem, size = 0x2000, scoped, tag = 'input window, operand 0, single buffered']
    #allocation3 [shape = 's32[1]{0}', space=sflag, size = 0x4, scoped, tag = 'scoped memory for tpu_custom_call.1']
    #allocation4 [shape = 's32[1]{0}', space=sflag, size = 0x4, scoped, tag = 'scoped memory for tpu_custom_call.1']
    #allocation5 [shape = 'u8[16384]{0}', space=vmem, size = 0x4000, scoped, tag = 'input window, operand 2, single buffered']
    #allocation6 [shape = 's32[1]{0}', space=sflag, size = 0x4, scoped, tag = 'scoped memory for tpu_custom_call.1']
    #allocation7 [shape = 'u8[8192]{0}', space=vmem, size = 0x2000, scoped, tag = 'output window, operand 0, single buffered']
    %8 = vsyncpa [#allocation3], 0
    %9 = vsyncpa [#allocation6], 0
    %10 = vsyncpa [#allocation4], 0
    // Predicated region
    $region2: #{tpu_custom_call.1} parent=1 // pred_check
      _
    $region3: #{tpu_custom_call.1} parent=1 // pred_check_branch
      %12 = sbr.rel (0) target = $region5
    $region4: #{tpu_custom_call.1} parent=1 // pred_region
      %s14 = ssub.s32 256, 256
      %15 = vsyncadd [#allocation3], %s14
      %s16 = sshll.u32 [#allocation2], 4
      %s17 = int_to_ptr.vmem [resolvable:$true] %s16
      %22 = dma.hbm_to_vmem [thread:$0]  %s0, 256, %s17, [#allocation3], 128, 128, 8
    $region5: #{tpu_custom_call.1} parent=1 // pred_fallthru
      _
    // Predicated region
    $region6: #{tpu_custom_call.1} parent=1 // pred_check
      _
    $region7: #{tpu_custom_call.1} parent=1 // pred_check_branch
      %24 = sbr.rel (0) target = $region9
    $region8: #{tpu_custom_call.1} parent=1 // pred_region
      _
    $region9: #{tpu_custom_call.1} parent=1 // pred_fallthru
      _
    // Predicated region
    $region10: #{tpu_custom_call.1} parent=1 // pred_check
      _
    $region11: #{tpu_custom_call.1} parent=1 // pred_check_branch
      %26 = sbr.rel (0) target = $region13
    $region12: #{tpu_custom_call.1} parent=1 // pred_region
      %s28 = ssub.s32 512, 512
      %29 = vsyncadd [#allocation6], %s28
      %s30 = sshll.u32 [#allocation5], 4
      %s31 = int_to_ptr.vmem [resolvable:$true] %s30
      %36 = dma.hbm_to_vmem [thread:$0]  %s2, 512, %s31, [#allocation6], 128, 128, 8
    $region13: #{tpu_custom_call.1} parent=1 // pred_fallthru
      _
    // Predicated region
    $region14: #{tpu_custom_call.1} parent=1 // pred_check
      _
    $region15: #{tpu_custom_call.1} parent=1 // pred_check_branch
      %38 = sbr.rel (0) target = $region17
    $region16: #{tpu_custom_call.1} parent=1 // pred_region
      %39 = dma.done [#allocation3], 256
    $region17: #{tpu_custom_call.1} parent=1 // pred_fallthru
      _
    // Predicated region
    $region18: #{tpu_custom_call.1} parent=1 // pred_check
      _
    $region19: #{tpu_custom_call.1} parent=1 // pred_check_branch
      %41 = sbr.rel (0) target = $region21
    $region20: #{tpu_custom_call.1} parent=1 // pred_region
      %42 = dma.done [#allocation6], 512
    $region21: #{tpu_custom_call.1} parent=1 // pred_fallthru
      _
    %v43 = vld [vmem:[#allocation2] sm:$0xff]
    %v44 = vld [vmem:[#allocation2 + $0x8] sm:$0xff]
    %v45 = vmul.f32 %v43, %v43
    %v46 = vmul.f32 %v44, %v44
    %vm47 = vcmask 261120
    %v48 = vsel %vm47, %v45, 0.0
    %49 = vadd.xlane.f32.xlu0 %v48
    %v50 = vpop.xlane.xlu0 %49
    %v51 = vsel %vm47, %v46, 0.0
    %52 = vadd.xlane.f32.xlu0 %v51
    %v53 = vpop.xlane.xlu0 %52
    %v54 = vrcp.pop 32.0
    %v55 = vmul.f32 %v50, %v54
    %v56 = vmul.f32 %v53, %v54
    %v57 = vadd.f32 %v55, 1e-06
    %v58 = vadd.f32 %v56, 1e-06
    %v59 = vrsqrt.pop %v57
    %v60 = vrsqrt.pop %v58
    %v61 = vld [vmem:[%s1] sm:$0x1]
    %v62 = vmul.f32 %v43, %v59
    %v63 = vmul.f32 %v44, %v60
    %v65 = vlaneseq
    %v66 = vshrl.u32 %v65, 7
    %v67 = vsub.s32 0, %v66
    %v68 = vrot.slane %v61, %v67
    %v70 = vmul.f32 %v68, %v62
    %v71 = vmul.f32 %v68, %v63
    %v72 = vld [vmem:[#allocation5] sm:$0xff]
    %v73 = vld [vmem:[#allocation5 + $0x8] sm:$0xff]
    %v74 = vld [vmem:[#allocation5 + $0x10] sm:$0xff]
    %v75 = vld [vmem:[#allocation5 + $0x18] sm:$0xff]
    %v77 = vsel %vm47, %v70, 0
    %v80 = vsel %vm47, %v71, 0
    %82 = vmatprep.subr.mxu0 0.0
    %83 = vmatpush1.msra.mxu0 %v72
    %84 = vmatprep.subr.mxu0 0.0
    %85 = vmatpush1.msra.mxu0 %v73
    %86 = vmatprep.subr.mxu0 0.0
    %87 = vmatpush1.msra.mxu0 %v74
    %88 = vmatprep.subr.mxu0 0.0
    %89 = vmatpush1.msra.mxu0 %v75
    %90 = vmatprep.subr.mxu0 0.0
    %91 = vmatpush1.msra.mxu0 0.0
    %92 = vmatprep.subr.mxu0 0.0
    %93 = vmatpush1.msra.mxu0 0.0
    %94 = vmatprep.subr.mxu0 0.0
    %95 = vmatpush1.msra.mxu0 0.0
    %96 = vmatprep.subr.mxu0 0.0
    %97 = vmatpush1.msra.mxu0 0.0
    %98 = vmatprep.subr.mxu0 0.0
    %99 = vmatpush1.msra.mxu0 0.0
    %100 = vmatprep.subr.mxu0 0.0
    %101 = vmatpush1.msra.mxu0 0.0
    %102 = vmatprep.subr.mxu0 0.0
    %103 = vmatpush1.msra.mxu0 0.0
    %104 = vmatprep.subr.mxu0 0.0
    %105 = vmatpush1.msra.mxu0 0.0
    %106 = vmatprep.subr.mxu0 0.0
    %107 = vmatpush1.msra.mxu0 0.0
    %108 = vmatprep.subr.mxu0 0.0
    %109 = vmatpush1.msra.mxu0 0.0
    %110 = vmatprep.subr.mxu0 0.0
    %111 = vmatpush1.msra.mxu0 0.0
    %112 = vmatprep.subr.mxu0 0.0
    %113 = vmatpush1.msra.mxu0 0.0
    %114 = vmatprep.subr.mxu0 0.0
    %115 = vmatpush1.msra.mxu0 0.0
    %116 = vmatprep.subr.mxu0 0.0
    %117 = vmatpush1.msra.mxu0 0.0
    %118 = vmatprep.subr.mxu0 0.0
    %119 = vmatpush1.msra.mxu0 0.0
    %120 = vmatprep.subr.mxu0 0.0
    %121 = vmatpush1.msra.mxu0 0.0
    %122 = vmatprep.subr.mxu0 0.0
    %123 = vmatpush1.msra.mxu0 0.0
    %124 = vmatprep.subr.mxu0 0.0
    %125 = vmatpush1.msra.mxu0 0.0
    %126 = vmatprep.subr.mxu0 0.0
    %127 = vmatpush1.msra.mxu0 0.0
    %128 = vmatprep.subr.mxu0 0.0
    %129 = vmatpush1.msra.mxu0 0.0
    %130 = vmatprep.subr.mxu0 0.0
    %131 = vmatpush1.msra.mxu0 0.0
    %132 = vmatprep.subr.mxu0 0.0
    %133 = vmatpush1.msra.mxu0 0.0
    %134 = vmatprep.subr.mxu0 0.0
    %135 = vmatpush1.msra.mxu0 0.0
    %136 = vmatprep.subr.mxu0 0.0
    %137 = vmatpush1.msra.mxu0 0.0
    %138 = vmatprep.subr.mxu0 0.0
    %139 = vmatpush1.msra.mxu0 0.0
    %140 = vmatprep.subr.mxu0 0.0
    %141 = vmatpush1.msra.mxu0 0.0
    %142 = vmatprep.subr.mxu0 0.0
    %143 = vmatpush1.msra.mxu0 0.0
    %144 = vmatprep.subr.mxu0 0.0
    %145 = vmatpush1.msra.mxu0 0.0
    %146 = vmatprep.mubr.f32.mxu0 0.0
    %147 = vmatmul.mubr.f32.gmra.mrb[0].mxu0 %v77
    %v148 = vpop.f32.mrb[0].mxu0
    %v149 = vadd.f32 0.0, %v148
    %v150 = vpop.f32.mrb[0].mxu0
    %151 = vmatprep.mubr.f32.mxu0 0.0
    %152 = vmatmul.mubr.f32.gmra.mrb[0].mxu0 %v80
    %v153 = vpop.f32.mrb[0].mxu0
    %v154 = vadd.f32 0.0, %v153
    %v155 = vpop.f32.mrb[0].mxu0
    %156 = vdwg.mxu0
    %157 = vst [vmem:[#allocation7] sm:$0xff] %v149
    %158 = vst [vmem:[#allocation7 + $0x8] sm:$0xff] %v154
    // Predicated region
    $region22: #{tpu_custom_call.1} parent=1 // pred_check
      _
    $region23: #{tpu_custom_call.1} parent=1 // pred_check_branch
      %160 = sbr.rel (0) target = $region25
    $region24: #{tpu_custom_call.1} parent=1 // pred_region
      %s162 = ssub.s32 256, 256
      %163 = vsyncadd [#allocation4], %s162
      %s164 = sshll.u32 [#allocation7], 4
      %s165 = int_to_ptr.vmem [resolvable:$true] %s164
      %170 = dma.vmem_to_hbm [thread:$0]  %s165, 256, %s3, [#allocation4], 128, 128, 8
    $region25: #{tpu_custom_call.1} parent=1 // pred_fallthru
      _
    // Predicated region
    $region26: #{tpu_custom_call.1} parent=1 // pred_check
      _
    $region27: #{tpu_custom_call.1} parent=1 // pred_check_branch
      %172 = sbr.rel (0) target = $region29
    $region28: #{tpu_custom_call.1} parent=1 // pred_region
      %173 = dma.done [#allocation4], 256
    $region29: #{tpu_custom_call.1} parent=1 // pred_fallthru
      _
    %174 = vsyncpa [#allocation3], 1
    %175 = vsyncpa [#allocation6], 1
    %176 = vsyncpa [#allocation4], 1

</llo_original>
